<compile_context>
chip_gen: v5e
topology: v5e:2x2
jax: 0.10.0
libtpu: 0.0.40
codegen_flags: <defaults>
</compile_context>

<pallas_src>
import functools

import jax
import jax.numpy as jnp
from jax import lax
from jax.experimental import pallas as pl
from jax.experimental.pallas import tpu as pltpu


def _round_up(x, m):
    return -(-x // m) * m


def _elu(y):
    # ELU(alpha=1) in f32; clamp the exp argument so the false branch never overflows.
    return jnp.where(y > 0.0, y, jnp.exp(jnp.minimum(y, 0.0)) - 1.0)


def _ddpg_body_kernel(p_ref, w1_ref, b1_ref, w2_ref, b2_ref, o_ref,
                      y1_ref, rhs_ref, *, lpad, w_out1, tail):
    """Fused conv1(s2)+ELU -> conv2(s1)+ELU for one batch-block.

    p_ref:   (1, 9*C_in, Lpad)      bf16  layer-1 im2col slab (lanes = batch x H1*W1)
    w1_ref:  (C_mid, 9*C_in)        bf16  fused-tap weights, layer 1
    b1_ref:  (C_mid, 1)             f32
    w2_ref:  (3, C_out, 3*C_mid)    bf16  layer-2 weights grouped by kh (per-group dot)
    b2_ref:  (C_out, 1)             f32
    o_ref:   (1, C_out, Lpad)       bf16  layer-2 activation (valid lanes decoded outside)
    y1_ref:  VMEM (C_mid, Lpad+tail) bf16 layer-1 activation parked in VMEM
    rhs_ref: VMEM (9*C_mid, Lpad)    bf16 in-VMEM im2col for layer 2
    """
    c_mid = y1_ref.shape[0]

    # ---- layer 1: single fused MXU contraction, f32 accumulate, bias + ELU ----
    y1 = jnp.dot(w1_ref[...], p_ref[0], preferred_element_type=jnp.float32)
    y1 = _elu(y1 + b1_ref[...])

    # Park layer-1 activation (bf16) in VMEM.  Zero only the `tail` lanes past lpad
    # that the largest tap shift can touch (those feed discarded output lanes but must
    # be initialized).  Scratch is per-core, so guarding this on program_id()==0 would
    # skip the init on the second TensorCore; the masked (C_mid x tail) store is noise.
    y1_ref[:, pl.ds(0, lpad)] = y1.astype(jnp.bfloat16)
    y1_ref[:, pl.ds(lpad, tail)] = jnp.zeros((c_mid, tail), jnp.bfloat16)

    # ---- layer 2: in-VMEM im2col interleaved with partial MXU dots ----
    # Output lane l encodes (b_local, h2, w2); tap (kh, kw) needs y1 at lane
    # l + kh*W1 + kw, which never crosses a batch-element boundary for valid lanes.
    # Each kh group: 3 shifted copies, then a K=3*C_mid partial dot, so the copies of
    # group kh+1 can run under the MXU work of group kh.
    y2 = None
    for kh in range(3):
        for kw in range(3):
            row = (kh * 3 + kw) * c_mid
            shift = kh * w_out1 + kw
            rhs_ref[pl.ds(row, c_mid), :] = y1_ref[:, pl.ds(shift, lpad)]
        part = jnp.dot(w2_ref[kh],
                       rhs_ref[pl.ds(kh * 3 * c_mid, 3 * c_mid), :],
                       preferred_element_type=jnp.float32)
        y2 = part if y2 is None else y2 + part

    # bias + ELU, store as bf16 (halves writeback + epilogue traffic).
    o_ref[0] = _elu(y2 + b2_ref[...]).astype(o_ref.dtype)


def ddpg_conv_body_forward(x, params, *, batch_block=None, target_lanes=8192,
                           vmem_cap_bytes=28 << 20):
    """Forward pass matching DDPGConvBody.forward (ELU(conv1 s2), ELU(conv2 s1), flatten)."""
    w1, b1, w2, b2 = params["w1"], params["b1"], params["w2"], params["b2"]
    n, c_in, hin, win = x.shape
    c_mid = w1.shape[0]
    c_out = w2.shape[0]

    h1 = (hin - 3) // 2 + 1          # layer-1 output H (stride 2, valid)
    w1o = (win - 3) // 2 + 1         # layer-1 output W
    h2, w2o = h1 - 2, w1o - 2        # layer-2 output H, W (stride 1, valid)
    hw1 = h1 * w1o
    tail = 2 * w1o + 2               # largest layer-2 tap shift

    def vmem_bytes(nb):
        lp = _round_up(nb * hw1, 128)
        return (9 * c_mid * lp * 2                 # rhs scratch (bf16)
                + c_mid * (lp + tail) * 2          # y1 scratch (bf16)
                + 2 * 9 * c_in * lp * 2            # p input, double-buffered (bf16)
                + 2 * c_out * lp * 2               # output, double-buffered (bf16)
                + (c_mid + 2 * c_out) * lp * 4)    # rough f32 temps (y1, y2, ELU)

    # Pick a batch block that makes each grid step lane-wide (amortizes the ~0.35us
    # per-step pipeline overhead) while staying well inside VMEM (v7x has only 64 MiB).
    if batch_block is None:
        nb = max(1, target_lanes // hw1)
    else:
        nb = max(1, batch_block)
    nb = min(nb, n)
    while nb > 1 and vmem_bytes(nb) > vmem_cap_bytes:
        nb -= 1

    g = -(-n // nb)
    # v7x has 2 TensorCores sharing the "parallel" grid axis: when there is more than
    # one step, prefer an even step count so both cores get work.
    if g > 1 and g % 2:
        for cand in range(nb, 0, -1):
            gc = -(-n // cand)
            if gc % 2 == 0 and gc <= 2 * g:
                nb, g = cand, gc
                break

    n_pad = g * nb
    lpad = _round_up(nb * hw1, 128)            # lane-dense width (multiple of 128)

    # ---- layer-1 im2col glue (XLA): all bf16; transpose the raw input once so the
    # 9-tap slab is built directly in (tap, c_in) x (batch-in-block, h1, w1) order
    # with no post-stack transpose of the duplicated data.
    # TODO(synk): move layer-1 im2col into the kernel via strided pl.ds loads from a
    # whole-image VMEM block to drop this XLA prologue entirely.
    xb = x.astype(jnp.bfloat16)
    if n_pad != n:
        xb = jnp.pad(xb, ((0, n_pad - n), (0, 0), (0, 0), (0, 0)))
    xt = xb.reshape(g, nb, c_in, hin, win).transpose(0, 2, 1, 3, 4)  # (g,c_in,nb,H,W)
    taps = []
    for kh in range(3):
        for kw in range(3):
            taps.append(lax.slice(
                xt, (0, 0, 0, kh, kw),
                (g, c_in, nb, kh + (h1 - 1) * 2 + 1, kw + (w1o - 1) * 2 + 1),
                (1, 1, 1, 2, 2)))
    p = jnp.stack(taps, axis=1).reshape(g, 9 * c_in, nb * hw1)
    if lpad != nb * hw1:
        p = jnp.pad(p, ((0, 0), (0, 0), (0, lpad - nb * hw1)))

    # Fused-tap weights: layer 1 as (C_mid, 9*C_in); layer 2 grouped by kh as
    # (3, C_out, 3*C_mid) so each partial dot indexes a full block (no lane slicing).
    w1f = jnp.transpose(w1, (0, 2, 3, 1)).reshape(c_mid, 9 * c_in).astype(jnp.bfloat16)
    w2f = (jnp.transpose(w2, (0, 2, 3, 1)).reshape(c_out, 3, 3 * c_mid)
           .transpose(1, 0, 2).astype(jnp.bfloat16))
    b1c = b1.reshape(c_mid, 1).astype(jnp.float32)
    b2c = b2.reshape(c_out, 1).astype(jnp.float32)

    kernel = functools.partial(_ddpg_body_kernel, lpad=lpad, w_out1=w1o, tail=tail)

    vmem_limit = int(min(max(32 << 20, 2 * vmem_bytes(nb)), 48 << 20))

    out = pl.pallas_call(
        kernel,
        out_shape=jax.ShapeDtypeStruct((g, c_out, lpad), jnp.bfloat16),
        grid=(g,),
        in_specs=[
            pl.BlockSpec((1, 9 * c_in, lpad), lambda i: (i, 0, 0)),
            pl.BlockSpec((c_mid, 9 * c_in), lambda i: (0, 0)),
            pl.BlockSpec((c_mid, 1), lambda i: (0, 0)),
            pl.BlockSpec((3, c_out, 3 * c_mid), lambda i: (0, 0, 0)),
            pl.BlockSpec((c_out, 1), lambda i: (0, 0)),
        ],
        out_specs=pl.BlockSpec((1, c_out, lpad), lambda i: (i, 0, 0)),
        scratch_shapes=[
            pltpu.VMEM((c_mid, lpad + tail), jnp.bfloat16),    # layer-1 activation
            pltpu.VMEM((9 * c_mid, lpad), jnp.bfloat16),       # layer-2 im2col RHS
        ],
        compiler_params=pltpu.CompilerParams(
            dimension_semantics=("parallel",),
            vmem_limit_bytes=vmem_limit),
    )(p, w1f, b1c, w2f, b2c)

    # Decode the lane-dense output back to PyTorch's y.view(N, -1) i.e. (C, H2, W2) order.
    out = out[:, :, : nb * hw1].reshape(g, c_out, nb, h1, w1o)
    out = out[:, :, :, :h2, :w2o]                                   # keep valid conv2 lanes
    out = jnp.transpose(out, (0, 2, 1, 3, 4)).reshape(n_pad, c_out * h2 * w2o)
    return out[:n].astype(jnp.float32)


def _reference_forward(x, params):
    """Pure-JAX reference (lax conv, f32) for validation."""
    def conv(x, w, b, stride):
        y = lax.conv_general_dilated(
            x, w, window_strides=(stride, stride), padding="VALID",
            dimension_numbers=("NCHW", "OIHW", "NCHW"))
        return jax.nn.elu(y + b.reshape(1, -1, 1, 1))

    y = conv(x, params["w1"], params["b1"], 2)
    y = conv(y, params["w2"], params["b2"], 1)
    return y.reshape(y.shape[0], -1)


if __name__ == "__main__":
    key = jax.random.PRNGKey(0)
    k_x, k_w1, k_b1, k_w2, k_b2 = jax.random.split(key, 5)

    # Small shapes consistent with the module: in_channels=4, 32 conv filters.
    N, C_IN, H, W = 2, 4, 16, 16
    x = jax.random.normal(k_x, (N, C_IN, H, W), dtype=jnp.float32)

    params = {
        "w1": 0.1 * jax.random.normal(k_w1, (32, C_IN, 3, 3), dtype=jnp.float32),
        "b1": 0.1 * jax.random.normal(k_b1, (32,), dtype=jnp.float32),
        "w2": 0.1 * jax.random.normal(k_w2, (32, 32, 3, 3), dtype=jnp.float32),
        "b2": 0.1 * jax.random.normal(k_b2, (32,), dtype=jnp.float32),
    }

    out = jax.block_until_ready(jax.jit(ddpg_conv_body_forward)(x, params))
    ref = jax.block_until_ready(_reference_forward(x, params))

    assert out.shape == (N, 32 * 5 * 5), out.shape   # 16 -> 7 via s2, 7 -> 5 via s1
    max_err = float(jnp.max(jnp.abs(out - ref)))
    # bf16 matmul operands + bf16 output store with f32 accumulation vs f32 reference.
    assert jnp.allclose(out, ref, atol=2e-2, rtol=2e-2), max_err

    print("KERNEL_OK")
</pallas_src>

<mosaic_0001>
module attributes {stable_mosaic.version = 11 : i64} {
  func.func @_ddpg_body_kernel(%arg0: i32, %arg1: memref<1x36x128xbf16, #tpu.memory_space<vmem>>, %arg2: memref<32x36xbf16, #tpu.memory_space<vmem>>, %arg3: memref<32x1xf32, #tpu.memory_space<vmem>>, %arg4: memref<3x32x96xbf16, #tpu.memory_space<vmem>>, %arg5: memref<32x1xf32, #tpu.memory_space<vmem>>, %arg6: memref<1x32x128xbf16, #tpu.memory_space<vmem>>, %arg7: memref<32x144xbf16, #tpu.memory_space<vmem>>, %arg8: memref<288x128xbf16, #tpu.memory_space<vmem>>) attributes {dimension_semantics = [#tpu.dimension_semantics<parallel>], iteration_bounds = array<i64: 1>, scalar_prefetch = 0 : i64, scratch_operands = 2 : i64, tpu.core_type = #tpu.core_type<tc>, window_params = [{transform_indices = @transform_0, window_bounds = array<i64: 1, 36, 128>}, {pipeline_mode = #tpu.pipeline_mode<synchronous>, transform_indices = @transform_1, window_bounds = array<i64: 32, 36>}, {pipeline_mode = #tpu.pipeline_mode<synchronous>, transform_indices = @transform_2, window_bounds = array<i64: 32, 1>}, {pipeline_mode = #tpu.pipeline_mode<synchronous>, transform_indices = @transform_3, window_bounds = array<i64: 3, 32, 96>}, {pipeline_mode = #tpu.pipeline_mode<synchronous>, transform_indices = @transform_4, window_bounds = array<i64: 32, 1>}, {transform_indices = @transform_5, window_bounds = array<i64: 1, 32, 128>}]} {
    %c0 = arith.constant 0 : index
    %c0_0 = arith.constant 0 : index
    %0 = vector.load %arg2[%c0, %c0_0] : memref<32x36xbf16, #tpu.memory_space<vmem>>, vector<32x36xbf16>
    %c0_1 = arith.constant 0 : index
    %c0_2 = arith.constant 0 : index
    %c0_3 = arith.constant 0 : index
    %1 = vector.load %arg1[%c0_1, %c0_2, %c0_3] : memref<1x36x128xbf16, #tpu.memory_space<vmem>>, vector<1x36x128xbf16>
    %2 = vector.shape_cast %1 : vector<1x36x128xbf16> to vector<36x128xbf16>
    %cst = arith.constant dense<0.000000e+00> : vector<32x128xf32>
    %3 = tpu.matmul %0, %2, %cst {dimension_numbers = #tpu.dot_dimension_numbers<[1], [0], [0], [1], [0, 0, 1, 1], [], []>} : vector<32x36xbf16>, vector<36x128xbf16>, vector<32x128xf32> -> vector<32x128xf32>
    %c0_4 = arith.constant 0 : index
    %c0_5 = arith.constant 0 : index
    %4 = vector.load %arg3[%c0_4, %c0_5] : memref<32x1xf32, #tpu.memory_space<vmem>>, vector<32x1xf32>
    %5 = vector.broadcast %4 : vector<32x1xf32> to vector<32x128xf32>
    %6 = arith.addf %3, %5 : vector<32x128xf32>
    %cst_6 = arith.constant 0.000000e+00 : f32
    %7 = vector.broadcast %cst_6 : f32 to vector<32x128xf32>
    %8 = arith.cmpf ogt, %6, %7 : vector<32x128xf32>
    %cst_7 = arith.constant 0.000000e+00 : f32
    %9 = vector.broadcast %cst_7 : f32 to vector<32x128xf32>
    %10 = arith.minimumf %6, %9 : vector<32x128xf32>
    %11 = math.exp %10 : vector<32x128xf32>
    %cst_8 = arith.constant 1.000000e+00 : f32
    %12 = vector.broadcast %cst_8 : f32 to vector<32x128xf32>
    %13 = arith.subf %11, %12 : vector<32x128xf32>
    %14 = arith.select %8, %6, %13 : vector<32x128xi1>, vector<32x128xf32>
    %15 = arith.truncf %14 : vector<32x128xf32> to vector<32x128xbf16>
    %c0_9 = arith.constant 0 : index
    %c0_10 = arith.constant 0 : index
    %16 = vector.load %arg7[%c0_9, %c0_10] : memref<32x144xbf16, #tpu.memory_space<vmem>>, vector<32x128xbf16>
    tpu.vector_store %arg7[%c0_9, %c0_10], %15 {strides = array<i32>} : memref<32x144xbf16, #tpu.memory_space<vmem>>, vector<32x128xbf16>,
    %cst_11 = arith.constant 0.000000e+00 : bf16
    %17 = vector.broadcast %cst_11 : bf16 to vector<32x16xbf16>
    %c0_12 = arith.constant 0 : index
    %c128 = arith.constant 128 : index
    %18 = vector.load %arg7[%c0_12, %c128] : memref<32x144xbf16, #tpu.memory_space<vmem>>, vector<32x16xbf16>
    tpu.vector_store %arg7[%c0_12, %c128], %17 {strides = array<i32>} : memref<32x144xbf16, #tpu.memory_space<vmem>>, vector<32x16xbf16>,
    %c0_13 = arith.constant 0 : index
    %c0_14 = arith.constant 0 : index
    %19 = vector.load %arg7[%c0_13, %c0_14] : memref<32x144xbf16, #tpu.memory_space<vmem>>, vector<32x128xbf16>
    %c0_15 = arith.constant 0 : index
    %c0_16 = arith.constant 0 : index
    %20 = vector.load %arg8[%c0_15, %c0_16] : memref<288x128xbf16, #tpu.memory_space<vmem>>, vector<32x128xbf16>
    tpu.vector_store %arg8[%c0_15, %c0_16], %19 {strides = array<i32>} : memref<288x128xbf16, #tpu.memory_space<vmem>>, vector<32x128xbf16>,
    %c0_17 = arith.constant 0 : index
    %c1 = arith.constant 1 : index
    %21 = vector.load %arg7[%c0_17, %c1] : memref<32x144xbf16, #tpu.memory_space<vmem>>, vector<32x128xbf16>
    %c32 = arith.constant 32 : index
    %c0_18 = arith.constant 0 : index
    %22 = vector.load %arg8[%c32, %c0_18] : memref<288x128xbf16, #tpu.memory_space<vmem>>, vector<32x128xbf16>
    tpu.vector_store %arg8[%c32, %c0_18], %21 {strides = array<i32>} : memref<288x128xbf16, #tpu.memory_space<vmem>>, vector<32x128xbf16>,
    %c0_19 = arith.constant 0 : index
    %c2 = arith.constant 2 : index
    %23 = vector.load %arg7[%c0_19, %c2] : memref<32x144xbf16, #tpu.memory_space<vmem>>, vector<32x128xbf16>
    %c64 = arith.constant 64 : index
    %c0_20 = arith.constant 0 : index
    %24 = vector.load %arg8[%c64, %c0_20] : memref<288x128xbf16, #tpu.memory_space<vmem>>, vector<32x128xbf16>
    tpu.vector_store %arg8[%c64, %c0_20], %23 {strides = array<i32>} : memref<288x128xbf16, #tpu.memory_space<vmem>>, vector<32x128xbf16>,
    %c0_21 = arith.constant 0 : index
    %c0_22 = arith.constant 0 : index
    %c0_23 = arith.constant 0 : index
    %25 = vector.load %arg4[%c0_21, %c0_22, %c0_23] : memref<3x32x96xbf16, #tpu.memory_space<vmem>>, vector<1x32x96xbf16>
    %26 = vector.shape_cast %25 : vector<1x32x96xbf16> to vector<32x96xbf16>
    %c0_24 = arith.constant 0 : index
    %c0_25 = arith.constant 0 : index
    %27 = vector.load %arg8[%c0_24, %c0_25] : memref<288x128xbf16, #tpu.memory_space<vmem>>, vector<96x128xbf16>
    %cst_26 = arith.constant dense<0.000000e+00> : vector<32x128xf32>
    %28 = tpu.matmul %26, %27, %cst_26 {dimension_numbers = #tpu.dot_dimension_numbers<[1], [0], [0], [1], [0, 0, 1, 1], [], []>} : vector<32x96xbf16>, vector<96x128xbf16>, vector<32x128xf32> -> vector<32x128xf32>
    %c0_27 = arith.constant 0 : index
    %c7 = arith.constant 7 : index
    %29 = vector.load %arg7[%c0_27, %c7] : memref<32x144xbf16, #tpu.memory_space<vmem>>, vector<32x128xbf16>
    %c96 = arith.constant 96 : index
    %c0_28 = arith.constant 0 : index
    %30 = vector.load %arg8[%c96, %c0_28] : memref<288x128xbf16, #tpu.memory_space<vmem>>, vector<32x128xbf16>
    tpu.vector_store %arg8[%c96, %c0_28], %29 {strides = array<i32>} : memref<288x128xbf16, #tpu.memory_space<vmem>>, vector<32x128xbf16>,
    %c0_29 = arith.constant 0 : index
    %c8 = arith.constant 8 : index
    %31 = vector.load %arg7[%c0_29, %c8] : memref<32x144xbf16, #tpu.memory_space<vmem>>, vector<32x128xbf16>
    %c128_30 = arith.constant 128 : index
    %c0_31 = arith.constant 0 : index
    %32 = vector.load %arg8[%c128_30, %c0_31] : memref<288x128xbf16, #tpu.memory_space<vmem>>, vector<32x128xbf16>
    tpu.vector_store %arg8[%c128_30, %c0_31], %31 {strides = array<i32>} : memref<288x128xbf16, #tpu.memory_space<vmem>>, vector<32x128xbf16>,
    %c0_32 = arith.constant 0 : index
    %c9 = arith.constant 9 : index
    %33 = vector.load %arg7[%c0_32, %c9] : memref<32x144xbf16, #tpu.memory_space<vmem>>, vector<32x128xbf16>
    %c160 = arith.constant 160 : index
    %c0_33 = arith.constant 0 : index
    %34 = vector.load %arg8[%c160, %c0_33] : memref<288x128xbf16, #tpu.memory_space<vmem>>, vector<32x128xbf16>
    tpu.vector_store %arg8[%c160, %c0_33], %33 {strides = array<i32>} : memref<288x128xbf16, #tpu.memory_space<vmem>>, vector<32x128xbf16>,
    %c1_34 = arith.constant 1 : index
    %c0_35 = arith.constant 0 : index
    %c0_36 = arith.constant 0 : index
    %35 = vector.load %arg4[%c1_34, %c0_35, %c0_36] : memref<3x32x96xbf16, #tpu.memory_space<vmem>>, vector<1x32x96xbf16>
    %36 = vector.shape_cast %35 : vector<1x32x96xbf16> to vector<32x96xbf16>
    %c96_37 = arith.constant 96 : index
    %c0_38 = arith.constant 0 : index
    %37 = vector.load %arg8[%c96_37, %c0_38] : memref<288x128xbf16, #tpu.memory_space<vmem>>, vector<96x128xbf16>
    %cst_39 = arith.constant dense<0.000000e+00> : vector<32x128xf32>
    %38 = tpu.matmul %36, %37, %cst_39 {dimension_numbers = #tpu.dot_dimension_numbers<[1], [0], [0], [1], [0, 0, 1, 1], [], []>} : vector<32x96xbf16>, vector<96x128xbf16>, vector<32x128xf32> -> vector<32x128xf32>
    %39 = arith.addf %28, %38 : vector<32x128xf32>
    %c0_40 = arith.constant 0 : index
    %c14 = arith.constant 14 : index
    %40 = vector.load %arg7[%c0_40, %c14] : memref<32x144xbf16, #tpu.memory_space<vmem>>, vector<32x128xbf16>
    %c192 = arith.constant 192 : index
    %c0_41 = arith.constant 0 : index
    %41 = vector.load %arg8[%c192, %c0_41] : memref<288x128xbf16, #tpu.memory_space<vmem>>, vector<32x128xbf16>
    tpu.vector_store %arg8[%c192, %c0_41], %40 {strides = array<i32>} : memref<288x128xbf16, #tpu.memory_space<vmem>>, vector<32x128xbf16>,
    %c0_42 = arith.constant 0 : index
    %c15 = arith.constant 15 : index
    %42 = vector.load %arg7[%c0_42, %c15] : memref<32x144xbf16, #tpu.memory_space<vmem>>, vector<32x128xbf16>
    %c224 = arith.constant 224 : index
    %c0_43 = arith.constant 0 : index
    %43 = vector.load %arg8[%c224, %c0_43] : memref<288x128xbf16, #tpu.memory_space<vmem>>, vector<32x128xbf16>
    tpu.vector_store %arg8[%c224, %c0_43], %42 {strides = array<i32>} : memref<288x128xbf16, #tpu.memory_space<vmem>>, vector<32x128xbf16>,
    %c0_44 = arith.constant 0 : index
    %c16 = arith.constant 16 : index
    %44 = vector.load %arg7[%c0_44, %c16] : memref<32x144xbf16, #tpu.memory_space<vmem>>, vector<32x128xbf16>
    %c256 = arith.constant 256 : index
    %c0_45 = arith.constant 0 : index
    %45 = vector.load %arg8[%c256, %c0_45] : memref<288x128xbf16, #tpu.memory_space<vmem>>, vector<32x128xbf16>
    tpu.vector_store %arg8[%c256, %c0_45], %44 {strides = array<i32>} : memref<288x128xbf16, #tpu.memory_space<vmem>>, vector<32x128xbf16>,
    %c2_46 = arith.constant 2 : index
    %c0_47 = arith.constant 0 : index
    %c0_48 = arith.constant 0 : index
    %46 = vector.load %arg4[%c2_46, %c0_47, %c0_48] : memref<3x32x96xbf16, #tpu.memory_space<vmem>>, vector<1x32x96xbf16>
    %47 = vector.shape_cast %46 : vector<1x32x96xbf16> to vector<32x96xbf16>
    %c192_49 = arith.constant 192 : index
    %c0_50 = arith.constant 0 : index
    %48 = vector.load %arg8[%c192_49, %c0_50] : memref<288x128xbf16, #tpu.memory_space<vmem>>, vector<96x128xbf16>
    %cst_51 = arith.constant dense<0.000000e+00> : vector<32x128xf32>
    %49 = tpu.matmul %47, %48, %cst_51 {dimension_numbers = #tpu.dot_dimension_numbers<[1], [0], [0], [1], [0, 0, 1, 1], [], []>} : vector<32x96xbf16>, vector<96x128xbf16>, vector<32x128xf32> -> vector<32x128xf32>
    %50 = arith.addf %39, %49 : vector<32x128xf32>
    %c0_52 = arith.constant 0 : index
    %c0_53 = arith.constant 0 : index
    %51 = vector.load %arg5[%c0_52, %c0_53] : memref<32x1xf32, #tpu.memory_space<vmem>>, vector<32x1xf32>
    %52 = vector.broadcast %51 : vector<32x1xf32> to vector<32x128xf32>
    %53 = arith.addf %50, %52 : vector<32x128xf32>
    %cst_54 = arith.constant 0.000000e+00 : f32
    %54 = vector.broadcast %cst_54 : f32 to vector<32x128xf32>
    %55 = arith.cmpf ogt, %53, %54 : vector<32x128xf32>
    %cst_55 = arith.constant 0.000000e+00 : f32
    %56 = vector.broadcast %cst_55 : f32 to vector<32x128xf32>
    %57 = arith.minimumf %53, %56 : vector<32x128xf32>
    %58 = math.exp %57 : vector<32x128xf32>
    %cst_56 = arith.constant 1.000000e+00 : f32
    %59 = vector.broadcast %cst_56 : f32 to vector<32x128xf32>
    %60 = arith.subf %58, %59 : vector<32x128xf32>
    %61 = arith.select %55, %53, %60 : vector<32x128xi1>, vector<32x128xf32>
    %62 = arith.truncf %61 : vector<32x128xf32> to vector<32x128xbf16>
    %c0_57 = arith.constant 0 : index
    %c0_58 = arith.constant 0 : index
    %c0_59 = arith.constant 0 : index
    %63 = vector.load %arg6[%c0_57, %c0_58, %c0_59] : memref<1x32x128xbf16, #tpu.memory_space<vmem>>, vector<1x32x128xbf16>
    %64 = vector.shape_cast %63 : vector<1x32x128xbf16> to vector<32x128xbf16>
    %65 = vector.shape_cast %62 : vector<32x128xbf16> to vector<1x32x128xbf16>
    tpu.vector_store %arg6[%c0_57, %c0_58, %c0_59], %65 {strides = array<i32>} : memref<1x32x128xbf16, #tpu.memory_space<vmem>>, vector<1x32x128xbf16>,
    return
  }
  func.func @transform_0(%arg0: i32) -> (i32, i32, i32) {
    %c0_i32 = arith.constant 0 : i32
    %c0_i32_0 = arith.constant 0 : i32
    %c0_i32_1 = arith.constant 0 : i32
    return %arg0, %c0_i32, %c0_i32_0 : i32, i32, i32
  }
  func.func @transform_1(%arg0: i32) -> (i32, i32) {
    %c0_i32 = arith.constant 0 : i32
    %c0_i32_0 = arith.constant 0 : i32
    %c0_i32_1 = arith.constant 0 : i32
    return %c0_i32, %c0_i32_0 : i32, i32
  }
  func.func @transform_2(%arg0: i32) -> (i32, i32) {
    %c0_i32 = arith.constant 0 : i32
    %c0_i32_0 = arith.constant 0 : i32
    %c0_i32_1 = arith.constant 0 : i32
    return %c0_i32, %c0_i32_0 : i32, i32
  }
  func.func @transform_3(%arg0: i32) -> (i32, i32, i32) {
    %c0_i32 = arith.constant 0 : i32
    %c0_i32_0 = arith.constant 0 : i32
    %c0_i32_1 = arith.constant 0 : i32
    %c0_i32_2 = arith.constant 0 : i32
    return %c0_i32, %c0_i32_0, %c0_i32_1 : i32, i32, i32
  }
  func.func @transform_4(%arg0: i32) -> (i32, i32) {
    %c0_i32 = arith.constant 0 : i32
    %c0_i32_0 = arith.constant 0 : i32
    %c0_i32_1 = arith.constant 0 : i32
    return %c0_i32, %c0_i32_0 : i32, i32
  }
  func.func @transform_5(%arg0: i32) -> (i32, i32, i32) {
    %c0_i32 = arith.constant 0 : i32
    %c0_i32_0 = arith.constant 0 : i32
    %c0_i32_1 = arith.constant 0 : i32
    return %arg0, %c0_i32, %c0_i32_0 : i32, i32, i32
  }
}

</mosaic_0001>

<llo_original>
// kernel: ddpg_conv_body_forward.1
$region0: #{ddpg_conv_body_forward.1}
  #allocation0 [shape = 'u32[]', space=smem, size = 0x4, offset = 0x4, fixed_abs, tag = 'smem constant byte address 0x4 - core index']
  #allocation1 [shape = 'u32[72,128]{1,0:T(1,128)}', space=vmem, size = 0x9000, scoped, tag = 'internal scratch']
  #allocation2 [shape = 'bf16[32,144]{1,0:T(8,128)(2,1)}', space=vmem, size = 0x4000, scoped, tag = 'scratch operand']
  #allocation3 [shape = 'bf16[288,128]{1,0:T(8,128)(2,1)}', space=vmem, size = 0x12000, scoped, tag = 'scratch operand']
  %s0 = inlined_call_operand.vmem [shape: bf16[1,36,128], index: 0, kind: input, shape index: {}]
  %s1 = inlined_call_operand.vmem [shape: bf16[32,36], index: 1, kind: input, shape index: {}]
  %s2 = inlined_call_operand.vmem [shape: f32[32,1], index: 2, kind: input, shape index: {}]
  %s3 = inlined_call_operand.vmem [shape: bf16[3,32,96], index: 3, kind: input, shape index: {}]
  %s4 = inlined_call_operand.vmem [shape: f32[32,1], index: 4, kind: input, shape index: {}]
  %s5 = inlined_call_operand.vmem [shape: bf16[1,32,128], index: 5, kind: output, shape index: {}]
  %s6 = sld [smem:[#allocation0]]
  $region30: #{ddpg_conv_body_forward.1} parent=0
    _
  %s8 = ssub.s32 1, %s6
  %s9 = scalar_select 0, %s8, %s6
  // Predicated region
  $region2: #{ddpg_conv_body_forward.1} parent=0 // pred_check
    _
  $region3: #{ddpg_conv_body_forward.1} parent=0 // pred_check_branch
    %11 = sbr.rel (0) target = $region5
  $region4: #{ddpg_conv_body_forward.1} parent=0 // pred_region
    _
  $region5: #{ddpg_conv_body_forward.1} parent=0 // pred_fallthru
    _
  // Predicated region
  $region6: #{ddpg_conv_body_forward.1} parent=0 // pred_check
    _
  $region7: #{ddpg_conv_body_forward.1} parent=0 // pred_check_branch
    %13 = sbr.rel (0) target = $region9
  $region8: #{ddpg_conv_body_forward.1} parent=0 // pred_region
    _
  $region9: #{ddpg_conv_body_forward.1} parent=0 // pred_fallthru
    _
  // Predicated region
  $region10: #{ddpg_conv_body_forward.1} parent=0 // pred_check
    _
  $region11: #{ddpg_conv_body_forward.1} parent=0 // pred_check_branch
    %15 = sbr.rel (0) target = $region13
  $region12: #{ddpg_conv_body_forward.1} parent=0 // pred_region
    _
  $region13: #{ddpg_conv_body_forward.1} parent=0 // pred_fallthru
    _
  // Predicated region
  $region14: #{ddpg_conv_body_forward.1} parent=0 // pred_check
    _
  $region15: #{ddpg_conv_body_forward.1} parent=0 // pred_check_branch
    %17 = sbr.rel (0) target = $region17
  $region16: #{ddpg_conv_body_forward.1} parent=0 // pred_region
    _
  $region17: #{ddpg_conv_body_forward.1} parent=0 // pred_fallthru
    _
  // Predicated region
  $region18: #{ddpg_conv_body_forward.1} parent=0 // pred_check
    _
  $region19: #{ddpg_conv_body_forward.1} parent=0 // pred_check_branch
    %19 = sbr.rel (0) target = $region21
  $region20: #{ddpg_conv_body_forward.1} parent=0 // pred_region
    _
  $region21: #{ddpg_conv_body_forward.1} parent=0 // pred_fallthru
    _
  %v21 = vld [vmem:[%s1] sm:$0xf]
  %v22 = vld [vmem:[%s1 + $0x4] sm:$0xf]
  %v23 = vld [vmem:[%s1 + $0x8] sm:$0xf]
  %v24 = vld [vmem:[%s1 + $0xc] sm:$0xf]
  %v25 = vld [vmem:[%s0] sm:$0xf]
  %v26 = vld [vmem:[%s0 + $0x4] sm:$0xf]
  %v27 = vld [vmem:[%s0 + $0x8] sm:$0xf]
  %v28 = vld [vmem:[%s0 + $0xc] sm:$0xf]
  %v29 = vld [vmem:[%s0 + $0x10] sm:$0x3]
  %v30 = vld [vmem:[%s2] sm:$0xff]
  %v31 = vld [vmem:[%s2 + $0x8] sm:$0xff]
  %v32 = vld [vmem:[%s2 + $0x10] sm:$0xff]
  %v33 = vld [vmem:[%s2 + $0x18] sm:$0xff]
  %35 = vset.pattern.permute.xlu0 0
  %36 = vperm.xlu0 %35, %v30
  %v37 = vpop.permute.xlu0 %36
  %40 = vset.pattern.permute.xlu0 0
  %41 = vperm.xlu0 %40, %v31
  %v42 = vpop.permute.xlu0 %41
  %45 = vset.pattern.permute.xlu0 0
  %46 = vperm.xlu0 %45, %v32
  %v47 = vpop.permute.xlu0 %46
  %50 = vset.pattern.permute.xlu0 0
  %51 = vperm.xlu0 %50, %v33
  %v52 = vpop.permute.xlu0 %51
  %v58 = vunpack.c.l.b16 %v21
  %v59 = vunpack.c.l.b16 %v22
  %v60 = vunpack.c.l.b16 %v23
  %v61 = vunpack.c.l.b16 %v24
  %v62 = vpack.c.b16 %v59, %v58
  %v63 = vpack.c.b16 %v61, %v60
  %v69 = vunpack.c.l.b16 %v25
  %v70 = vunpack.c.l.b16 %v26
  %v71 = vunpack.c.l.b16 %v27
  %v72 = vunpack.c.l.b16 %v28
  %v73 = vunpack.c.l.b16 %v29
  %v74 = vpack.c.b16 %v70, %v69
  %v75 = vpack.c.b16 %v72, %v71
  %v76 = vpack.c.b16 %v73, %v73
  %vm79 = vcmask 293888
  %v81 = vsel %vm79, %v62, 0
  %v84 = vsel %vm79, %v63, 0
  %vm86 = vcmask 1041408
  %v88 = vsel %vm86, %v76, 0
  %90 = vmatpush.bf16.msra.mxu0 0
  %91 = vmatpush.bf16.msra.mxu0 0
  %92 = vmatpush.bf16.msra.mxu0 0
  %93 = vmatpush.bf16.msra.mxu0 0
  %94 = vmatpush.bf16.msra.mxu0 0
  %95 = vmatpush.bf16.msra.mxu0 %v88
  %96 = vmatpush.bf16.msra.mxu0 %v75
  %97 = vmatpush.bf16.msra.mxu0 %v74
  %98 = vmatmul.bf16.gmra.mxu0 %v81
  %v99 = vpop.f32.mrf.mxu0
  %v100 = vadd.f32 %v37, %v99
  %v101 = vpop.f32.mrf.mxu0
  %v102 = vadd.f32 %v42, %v101
  %103 = vmatmul.bf16.gmra.mxu0 %v84
  %v104 = vpop.f32.mrf.mxu0
  %v105 = vadd.f32 %v47, %v104
  %v106 = vpop.f32.mrf.mxu0
  %v107 = vadd.f32 %v52, %v106
  %108 = vdwg.mxu0
  %vm109 = vcmp.gt.f32.partialorder %v100, 0.0
  %vm110 = vcmp.gt.f32.partialorder %v102, 0.0
  %vm111 = vcmp.gt.f32.partialorder %v105, 0.0
  %vm112 = vcmp.gt.f32.partialorder %v107, 0.0
  %v113 = vmin.f32 %v100, 0.0
  %v114 = vmin.f32 %v102, 0.0
  %v115 = vmin.f32 %v105, 0.0
  %v116 = vmin.f32 %v107, 0.0
  %v117 = vmul.f32 %v113, 1.442695
  %v118 = vpow.pop %v117
  %v119 = vmul.f32 %v114, 1.442695
  %v120 = vpow.pop %v119
  %v121 = vmul.f32 %v115, 1.442695
  %v122 = vpow.pop %v121
  %v123 = vmul.f32 %v116, 1.442695
  %v124 = vpow.pop %v123
  %v125 = vsub.f32 %v118, 1.0
  %v126 = vsub.f32 %v120, 1.0
  %v127 = vsub.f32 %v122, 1.0
  %v128 = vsub.f32 %v124, 1.0
  %v129 = vsel %vm109, %v100, %v125
  %v130 = vsel %vm110, %v102, %v126
  %v131 = vsel %vm111, %v105, %v127
  %v132 = vsel %vm112, %v107, %v128
  %v133 = vpack.c.bf16 %v129, %v129
  %v134 = vpack.c.bf16 %v130, %v130
  %v135 = vpack.c.bf16 %v131, %v131
  %v136 = vpack.c.bf16 %v132, %v132
  %137 = vst [vmem:[#allocation2] sm:$0xf] %v133
  %138 = vst [vmem:[#allocation2 + $0x8] sm:$0xf] %v134
  %139 = vst [vmem:[#allocation2 + $0x10] sm:$0xf] %v135
  %140 = vst [vmem:[#allocation2 + $0x18] sm:$0xf] %v136
  %vm141 = vcmask 125952
  %142 = vst.msk [vmem:[#allocation2 + $0x4] sm:$0xf] %vm141, 0
  %143 = vst.msk [vmem:[#allocation2 + $0xc] sm:$0xf] %vm141, 0
  %144 = vst.msk [vmem:[#allocation2 + $0x14] sm:$0xf] %vm141, 0
  %145 = vst.msk [vmem:[#allocation2 + $0x1c] sm:$0xf] %vm141, 0
  %v146 = vld [vmem:[#allocation2] sm:$0xf]
  %v147 = vld [vmem:[#allocation2 + $0x8] sm:$0xf]
  %v148 = vld [vmem:[#allocation2 + $0x10] sm:$0xf]
  %v149 = vld [vmem:[#allocation2 + $0x18] sm:$0xf]
  %150 = vst [vmem:[#allocation3] sm:$0xf] %v146
  %151 = vst [vmem:[#allocation3 + $0x4] sm:$0xf] %v147
  %152 = vst [vmem:[#allocation3 + $0x8] sm:$0xf] %v148
  %153 = vst [vmem:[#allocation3 + $0xc] sm:$0xf] %v149
  %v154 = vld [vmem:[#allocation2] sm:$0xff]
  %v155 = vld [vmem:[#allocation2 + $0x8] sm:$0xff]
  %v156 = vld [vmem:[#allocation2 + $0x10] sm:$0xff]
  %v157 = vld [vmem:[#allocation2 + $0x18] sm:$0xff]
  %162 = vrot.lane.b32.xlu0 %v154, 127
  %v163 = vpop.permute.xlu0 %162
  %164 = vrot.lane.b32.xlu0 %v155, 127
  %v165 = vpop.permute.xlu0 %164
  %166 = vrot.lane.b32.xlu0 %v156, 127
  %v167 = vpop.permute.xlu0 %166
  %168 = vrot.lane.b32.xlu0 %v157, 127
  %v169 = vpop.permute.xlu0 %168
  %v170 = vrot.slane %v163, 4
  %v171 = vrot.slane %v165, 4
  %v172 = vrot.slane %v167, 4
  %v173 = vrot.slane %v169, 4
  %vm174 = vcmask 1039360
  %v175 = vsel %vm174, %v163, %v170
  %v176 = vsel %vm174, %v165, %v171
  %v177 = vsel %vm174, %v167, %v172
  %v178 = vsel %vm174, %v169, %v173
  %183 = vst [vmem:[#allocation3 + $0x10] sm:$0xf] %v175
  %184 = vst [vmem:[#allocation3 + $0x14] sm:$0xf] %v176
  %185 = vst [vmem:[#allocation3 + $0x18] sm:$0xf] %v177
  %186 = vst [vmem:[#allocation3 + $0x1c] sm:$0xf] %v178
  %v187 = vld [vmem:[#allocation2] sm:$0xff]
  %v188 = vld [vmem:[#allocation2 + $0x8] sm:$0xff]
  %v189 = vld [vmem:[#allocation2 + $0x10] sm:$0xff]
  %v190 = vld [vmem:[#allocation2 + $0x18] sm:$0xff]
  %195 = vrot.lane.b32.xlu0 %v187, 126
  %v196 = vpop.permute.xlu0 %195
  %197 = vrot.lane.b32.xlu0 %v188, 126
  %v198 = vpop.permute.xlu0 %197
  %199 = vrot.lane.b32.xlu0 %v189, 126
  %v200 = vpop.permute.xlu0 %199
  %201 = vrot.lane.b32.xlu0 %v190, 126
  %v202 = vpop.permute.xlu0 %201
  %v203 = vrot.slane %v196, 4
  %v204 = vrot.slane %v198, 4
  %v205 = vrot.slane %v200, 4
  %v206 = vrot.slane %v202, 4
  %vm207 = vcmask 1031168
  %v208 = vsel %vm207, %v196, %v203
  %v209 = vsel %vm207, %v198, %v204
  %v210 = vsel %vm207, %v200, %v205
  %v211 = vsel %vm207, %v202, %v206
  %216 = vst [vmem:[#allocation3 + $0x20] sm:$0xf] %v208
  %217 = vst [vmem:[#allocation3 + $0x24] sm:$0xf] %v209
  %218 = vst [vmem:[#allocation3 + $0x28] sm:$0xf] %v210
  %219 = vst [vmem:[#allocation3 + $0x2c] sm:$0xf] %v211
  %v220 = vld [vmem:[%s3] sm:$0xf]
  %v221 = vld [vmem:[%s3 + $0x4] sm:$0xf]
  %v222 = vld [vmem:[%s3 + $0x8] sm:$0xf]
  %v223 = vld [vmem:[%s3 + $0xc] sm:$0xf]
  %v224 = vld [vmem:[#allocation3] sm:$0xf]
  %v225 = vld [vmem:[#allocation3 + $0x4] sm:$0xf]
  %v226 = vld [vmem:[#allocation3 + $0x8] sm:$0xf]
  %v227 = vld [vmem:[#allocation3 + $0xc] sm:$0xf]
  %v228 = vld [vmem:[#allocation3 + $0x10] sm:$0xf]
  %v229 = vld [vmem:[#allocation3 + $0x14] sm:$0xf]
  %v230 = vld [vmem:[#allocation3 + $0x18] sm:$0xf]
  %v231 = vld [vmem:[#allocation3 + $0x1c] sm:$0xf]
  %v232 = vld [vmem:[#allocation3 + $0x20] sm:$0xf]
  %v233 = vld [vmem:[#allocation3 + $0x24] sm:$0xf]
  %v234 = vld [vmem:[#allocation3 + $0x28] sm:$0xf]
  %v235 = vld [vmem:[#allocation3 + $0x2c] sm:$0xf]
  %v236 = vld [vmem:[#allocation2] sm:$0xff]
  %v237 = vld [vmem:[#allocation2 + $0x8] sm:$0xff]
  %v238 = vld [vmem:[#allocation2 + $0x10] sm:$0xff]
  %v239 = vld [vmem:[#allocation2 + $0x18] sm:$0xff]
  %244 = vrot.lane.b32.xlu0 %v236, 121
  %v245 = vpop.permute.xlu0 %244
  %246 = vrot.lane.b32.xlu0 %v237, 121
  %v247 = vpop.permute.xlu0 %246
  %248 = vrot.lane.b32.xlu0 %v238, 121
  %v249 = vpop.permute.xlu0 %248
  %250 = vrot.lane.b32.xlu0 %v239, 121
  %v251 = vpop.permute.xlu0 %250
  %v252 = vrot.slane %v245, 4
  %v253 = vrot.slane %v247, 4
  %v254 = vrot.slane %v249, 4
  %v255 = vrot.slane %v251, 4
  %vm256 = vcmask 990208
  %v257 = vsel %vm256, %v245, %v252
  %v258 = vsel %vm256, %v247, %v253
  %v259 = vsel %vm256, %v249, %v254
  %v260 = vsel %vm256, %v251, %v255
  %265 = vst [vmem:[#allocation3 + $0x30] sm:$0xf] %v257
  %266 = vst [vmem:[#allocation3 + $0x34] sm:$0xf] %v258
  %267 = vst [vmem:[#allocation3 + $0x38] sm:$0xf] %v259
  %268 = vst [vmem:[#allocation3 + $0x3c] sm:$0xf] %v260
  %v269 = vld [vmem:[#allocation2] sm:$0xff]
  %v270 = vld [vmem:[#allocation2 + $0x8] sm:$0xff]
  %v271 = vld [vmem:[#allocation2 + $0x10] sm:$0xff]
  %v272 = vld [vmem:[#allocation2 + $0x18] sm:$0xff]
  %277 = vrot.lane.b32.xlu0 %v269, 120
  %v278 = vpop.permute.xlu0 %277
  %279 = vrot.lane.b32.xlu0 %v270, 120
  %v280 = vpop.permute.xlu0 %279
  %281 = vrot.lane.b32.xlu0 %v271, 120
  %v282 = vpop.permute.xlu0 %281
  %283 = vrot.lane.b32.xlu0 %v272, 120
  %v284 = vpop.permute.xlu0 %283
  %v285 = vrot.slane %v278, 4
  %v286 = vrot.slane %v280, 4
  %v287 = vrot.slane %v282, 4
  %v288 = vrot.slane %v284, 4
  %vm289 = vcmask 982016
  %v290 = vsel %vm289, %v278, %v285
  %v291 = vsel %vm289, %v280, %v286
  %v292 = vsel %vm289, %v282, %v287
  %v293 = vsel %vm289, %v284, %v288
  %298 = vst [vmem:[#allocation3 + $0x40] sm:$0xf] %v290
  %299 = vst [vmem:[#allocation3 + $0x44] sm:$0xf] %v291
  %300 = vst [vmem:[#allocation3 + $0x48] sm:$0xf] %v292
  %301 = vst [vmem:[#allocation3 + $0x4c] sm:$0xf] %v293
  %v302 = vld [vmem:[#allocation2] sm:$0xff]
  %v303 = vld [vmem:[#allocation2 + $0x8] sm:$0xff]
  %v304 = vld [vmem:[#allocation2 + $0x10] sm:$0xff]
  %v305 = vld [vmem:[#allocation2 + $0x18] sm:$0xff]
  %310 = vrot.lane.b32.xlu0 %v302, 119
  %v311 = vpop.permute.xlu0 %310
  %312 = vrot.lane.b32.xlu0 %v303, 119
  %v313 = vpop.permute.xlu0 %312
  %314 = vrot.lane.b32.xlu0 %v304, 119
  %v315 = vpop.permute.xlu0 %314
  %316 = vrot.lane.b32.xlu0 %v305, 119
  %v317 = vpop.permute.xlu0 %316
  %v318 = vrot.slane %v311, 4
  %v319 = vrot.slane %v313, 4
  %v320 = vrot.slane %v315, 4
  %v321 = vrot.slane %v317, 4
  %vm322 = vcmask 973824
  %v323 = vsel %vm322, %v311, %v318
  %v324 = vsel %vm322, %v313, %v319
  %v325 = vsel %vm322, %v315, %v320
  %v326 = vsel %vm322, %v317, %v321
  %331 = vst [vmem:[#allocation3 + $0x50] sm:$0xf] %v323
  %332 = vst [vmem:[#allocation3 + $0x54] sm:$0xf] %v324
  %333 = vst [vmem:[#allocation3 + $0x58] sm:$0xf] %v325
  %334 = vst [vmem:[#allocation3 + $0x5c] sm:$0xf] %v326
  %s335 = scalar_lea.vmem %s3, 16
  %v336 = vld [vmem:[%s335] sm:$0xf]
  %v337 = vld [vmem:[%s335 + $0x4] sm:$0xf]
  %v338 = vld [vmem:[%s335 + $0x8] sm:$0xf]
  %v339 = vld [vmem:[%s335 + $0xc] sm:$0xf]
  %v340 = vld [vmem:[#allocation3 + $0x30] sm:$0xf]
  %v341 = vld [vmem:[#allocation3 + $0x34] sm:$0xf]
  %v342 = vld [vmem:[#allocation3 + $0x38] sm:$0xf]
  %v343 = vld [vmem:[#allocation3 + $0x3c] sm:$0xf]
  %v344 = vld [vmem:[#allocation3 + $0x40] sm:$0xf]
  %v345 = vld [vmem:[#allocation3 + $0x44] sm:$0xf]
  %v346 = vld [vmem:[#allocation3 + $0x48] sm:$0xf]
  %v347 = vld [vmem:[#allocation3 + $0x4c] sm:$0xf]
  %v348 = vld [vmem:[#allocation3 + $0x50] sm:$0xf]
  %v349 = vld [vmem:[#allocation3 + $0x54] sm:$0xf]
  %v350 = vld [vmem:[#allocation3 + $0x58] sm:$0xf]
  %v351 = vld [vmem:[#allocation3 + $0x5c] sm:$0xf]
  %v356 = vunpack.c.l.b16 %v336
  %v357 = vunpack.c.l.b16 %v337
  %v358 = vunpack.c.l.b16 %v338
  %v359 = vunpack.c.l.b16 %v339
  %v360 = vpack.c.b16 %v357, %v356
  %v361 = vpack.c.b16 %v359, %v358
  %v374 = vunpack.c.l.b16 %v340
  %v375 = vunpack.c.l.b16 %v341
  %v376 = vunpack.c.l.b16 %v342
  %v377 = vunpack.c.l.b16 %v343
  %v378 = vunpack.c.l.b16 %v344
  %v379 = vunpack.c.l.b16 %v345
  %v380 = vunpack.c.l.b16 %v346
  %v381 = vunpack.c.l.b16 %v347
  %v382 = vunpack.c.l.b16 %v348
  %v383 = vunpack.c.l.b16 %v349
  %v384 = vunpack.c.l.b16 %v350
  %v385 = vunpack.c.l.b16 %v351
  %v386 = vpack.c.b16 %v375, %v374
  %v387 = vpack.c.b16 %v377, %v376
  %v388 = vpack.c.b16 %v379, %v378
  %v389 = vpack.c.b16 %v381, %v380
  %v390 = vpack.c.b16 %v383, %v382
  %v391 = vpack.c.b16 %v385, %v384
  %vm398 = vcmask 785408
  %v400 = vsel %vm398, %v360, 0
  %v403 = vsel %vm398, %v361, 0
  %405 = vmatpush.bf16.msra.mxu0 0
  %406 = vmatpush.bf16.msra.mxu0 0
  %407 = vmatpush.bf16.msra.mxu0 %v391
  %408 = vmatpush.bf16.msra.mxu0 %v390
  %409 = vmatpush.bf16.msra.mxu0 %v389
  %410 = vmatpush.bf16.msra.mxu0 %v388
  %411 = vmatpush.bf16.msra.mxu0 %v387
  %412 = vmatpush.bf16.msra.mxu0 %v386
  %413 = vmatmul.bf16.gmra.mxu0 %v400
  %v414 = vpop.f32.mrf.mxu0
  %v415 = vadd.f32 0.0, %v414
  %v416 = vpop.f32.mrf.mxu0
  %v417 = vadd.f32 0.0, %v416
  %418 = vmatmul.bf16.gmra.mxu0 %v403
  %v419 = vpop.f32.mrf.mxu0
  %v420 = vadd.f32 0.0, %v419
  %v421 = vpop.f32.mrf.mxu0
  %v422 = vadd.f32 0.0, %v421
  %423 = vdwg.mxu0
  %v428 = vunpack.c.l.b16 %v220
  %v429 = vunpack.c.l.b16 %v221
  %v430 = vunpack.c.l.b16 %v222
  %v431 = vunpack.c.l.b16 %v223
  %v432 = vpack.c.b16 %v429, %v428
  %v433 = vpack.c.b16 %v431, %v430
  %v446 = vunpack.c.l.b16 %v224
  %v447 = vunpack.c.l.b16 %v225
  %v448 = vunpack.c.l.b16 %v226
  %v449 = vunpack.c.l.b16 %v227
  %v450 = vunpack.c.l.b16 %v228
  %v451 = vunpack.c.l.b16 %v229
  %v452 = vunpack.c.l.b16 %v230
  %v453 = vunpack.c.l.b16 %v231
  %v454 = vunpack.c.l.b16 %v232
  %v455 = vunpack.c.l.b16 %v233
  %v456 = vunpack.c.l.b16 %v234
  %v457 = vunpack.c.l.b16 %v235
  %v458 = vpack.c.b16 %v447, %v446
  %v459 = vpack.c.b16 %v449, %v448
  %v460 = vpack.c.b16 %v451, %v450
  %v461 = vpack.c.b16 %v453, %v452
  %v462 = vpack.c.b16 %v455, %v454
  %v463 = vpack.c.b16 %v457, %v456
  %v471 = vsel %vm398, %v432, 0
  %v474 = vsel %vm398, %v433, 0
  %476 = vmatpush.bf16.msra.mxu0 0
  %477 = vmatpush.bf16.msra.mxu0 0
  %478 = vmatpush.bf16.msra.mxu0 %v463
  %479 = vmatpush.bf16.msra.mxu0 %v462
  %480 = vmatpush.bf16.msra.mxu0 %v461
  %481 = vmatpush.bf16.msra.mxu0 %v460
  %482 = vmatpush.bf16.msra.mxu0 %v459
  %483 = vmatpush.bf16.msra.mxu0 %v458
  %484 = vmatmul.bf16.gmra.mxu0 %v471
  %v485 = vpop.f32.mrf.mxu0
  %v486 = vadd.f32 %v415, %v485
  %v487 = vpop.f32.mrf.mxu0
  %v488 = vadd.f32 %v417, %v487
  %489 = vmatmul.bf16.gmra.mxu0 %v474
  %v490 = vpop.f32.mrf.mxu0
  %v491 = vadd.f32 %v420, %v490
  %v492 = vpop.f32.mrf.mxu0
  %v493 = vadd.f32 %v422, %v492
  %494 = vdwg.mxu0
  %v495 = vld [vmem:[#allocation2] sm:$0xff]
  %v496 = vld [vmem:[#allocation2 + $0x8] sm:$0xff]
  %v497 = vld [vmem:[#allocation2 + $0x10] sm:$0xff]
  %v498 = vld [vmem:[#allocation2 + $0x18] sm:$0xff]
  %503 = vrot.lane.b32.xlu0 %v495, 114
  %v504 = vpop.permute.xlu0 %503
  %505 = vrot.lane.b32.xlu0 %v496, 114
  %v506 = vpop.permute.xlu0 %505
  %507 = vrot.lane.b32.xlu0 %v497, 114
  %v508 = vpop.permute.xlu0 %507
  %509 = vrot.lane.b32.xlu0 %v498, 114
  %v510 = vpop.permute.xlu0 %509
  %v511 = vrot.slane %v504, 4
  %v512 = vrot.slane %v506, 4
  %v513 = vrot.slane %v508, 4
  %v514 = vrot.slane %v510, 4
  %vm515 = vcmask 932864
  %v516 = vsel %vm515, %v504, %v511
  %v517 = vsel %vm515, %v506, %v512
  %v518 = vsel %vm515, %v508, %v513
  %v519 = vsel %vm515, %v510, %v514
  %524 = vst [vmem:[#allocation3 + $0x60] sm:$0xf] %v516
  %525 = vst [vmem:[#allocation3 + $0x64] sm:$0xf] %v517
  %526 = vst [vmem:[#allocation3 + $0x68] sm:$0xf] %v518
  %527 = vst [vmem:[#allocation3 + $0x6c] sm:$0xf] %v519
  %v528 = vld [vmem:[#allocation2] sm:$0xff]
  %v529 = vld [vmem:[#allocation2 + $0x8] sm:$0xff]
  %v530 = vld [vmem:[#allocation2 + $0x10] sm:$0xff]
  %v531 = vld [vmem:[#allocation2 + $0x18] sm:$0xff]
  %536 = vrot.lane.b32.xlu0 %v528, 113
  %v537 = vpop.permute.xlu0 %536
  %538 = vrot.lane.b32.xlu0 %v529, 113
  %v539 = vpop.permute.xlu0 %538
  %540 = vrot.lane.b32.xlu0 %v530, 113
  %v541 = vpop.permute.xlu0 %540
  %542 = vrot.lane.b32.xlu0 %v531, 113
  %v543 = vpop.permute.xlu0 %542
  %v544 = vrot.slane %v537, 4
  %v545 = vrot.slane %v539, 4
  %v546 = vrot.slane %v541, 4
  %v547 = vrot.slane %v543, 4
  %vm548 = vcmask 924672
  %v549 = vsel %vm548, %v537, %v544
  %v550 = vsel %vm548, %v539, %v545
  %v551 = vsel %vm548, %v541, %v546
  %v552 = vsel %vm548, %v543, %v547
  %557 = vst [vmem:[#allocation3 + $0x70] sm:$0xf] %v549
  %558 = vst [vmem:[#allocation3 + $0x74] sm:$0xf] %v550
  %559 = vst [vmem:[#allocation3 + $0x78] sm:$0xf] %v551
  %560 = vst [vmem:[#allocation3 + $0x7c] sm:$0xf] %v552
  %v561 = vld [vmem:[#allocation2] sm:$0xff]
  %v562 = vld [vmem:[#allocation2 + $0x8] sm:$0xff]
  %v563 = vld [vmem:[#allocation2 + $0x10] sm:$0xff]
  %v564 = vld [vmem:[#allocation2 + $0x18] sm:$0xff]
  %569 = vrot.lane.b32.xlu0 %v561, 112
  %v570 = vpop.permute.xlu0 %569
  %571 = vrot.lane.b32.xlu0 %v562, 112
  %v572 = vpop.permute.xlu0 %571
  %573 = vrot.lane.b32.xlu0 %v563, 112
  %v574 = vpop.permute.xlu0 %573
  %575 = vrot.lane.b32.xlu0 %v564, 112
  %v576 = vpop.permute.xlu0 %575
  %v577 = vrot.slane %v570, 4
  %v578 = vrot.slane %v572, 4
  %v579 = vrot.slane %v574, 4
  %v580 = vrot.slane %v576, 4
  %vm581 = vcmask 916480
  %v582 = vsel %vm581, %v570, %v577
  %v583 = vsel %vm581, %v572, %v578
  %v584 = vsel %vm581, %v574, %v579
  %v585 = vsel %vm581, %v576, %v580
  %590 = vst [vmem:[#allocation3 + $0x80] sm:$0xf] %v582
  %591 = vst [vmem:[#allocation3 + $0x84] sm:$0xf] %v583
  %592 = vst [vmem:[#allocation3 + $0x88] sm:$0xf] %v584
  %593 = vst [vmem:[#allocation3 + $0x8c] sm:$0xf] %v585
  %s594 = scalar_lea.vmem %s3, 32
  %v595 = vld [vmem:[%s594] sm:$0xf]
  %v596 = vld [vmem:[%s594 + $0x4] sm:$0xf]
  %v597 = vld [vmem:[%s594 + $0x8] sm:$0xf]
  %v598 = vld [vmem:[%s594 + $0xc] sm:$0xf]
  %v599 = vld [vmem:[#allocation3 + $0x60] sm:$0xf]
  %v600 = vld [vmem:[#allocation3 + $0x64] sm:$0xf]
  %v601 = vld [vmem:[#allocation3 + $0x68] sm:$0xf]
  %v602 = vld [vmem:[#allocation3 + $0x6c] sm:$0xf]
  %v603 = vld [vmem:[#allocation3 + $0x70] sm:$0xf]
  %v604 = vld [vmem:[#allocation3 + $0x74] sm:$0xf]
  %v605 = vld [vmem:[#allocation3 + $0x78] sm:$0xf]
  %v606 = vld [vmem:[#allocation3 + $0x7c] sm:$0xf]
  %v607 = vld [vmem:[#allocation3 + $0x80] sm:$0xf]
  %v608 = vld [vmem:[#allocation3 + $0x84] sm:$0xf]
  %v609 = vld [vmem:[#allocation3 + $0x88] sm:$0xf]
  %v610 = vld [vmem:[#allocation3 + $0x8c] sm:$0xf]
  %v615 = vunpack.c.l.b16 %v595
  %v616 = vunpack.c.l.b16 %v596
  %v617 = vunpack.c.l.b16 %v597
  %v618 = vunpack.c.l.b16 %v598
  %v619 = vpack.c.b16 %v616, %v615
  %v620 = vpack.c.b16 %v618, %v617
  %v633 = vunpack.c.l.b16 %v599
  %v634 = vunpack.c.l.b16 %v600
  %v635 = vunpack.c.l.b16 %v601
  %v636 = vunpack.c.l.b16 %v602
  %v637 = vunpack.c.l.b16 %v603
  %v638 = vunpack.c.l.b16 %v604
  %v639 = vunpack.c.l.b16 %v605
  %v640 = vunpack.c.l.b16 %v606
  %v641 = vunpack.c.l.b16 %v607
  %v642 = vunpack.c.l.b16 %v608
  %v643 = vunpack.c.l.b16 %v609
  %v644 = vunpack.c.l.b16 %v610
  %v645 = vpack.c.b16 %v634, %v633
  %v646 = vpack.c.b16 %v636, %v635
  %v647 = vpack.c.b16 %v638, %v637
  %v648 = vpack.c.b16 %v640, %v639
  %v649 = vpack.c.b16 %v642, %v641
  %v650 = vpack.c.b16 %v644, %v643
  %v658 = vsel %vm398, %v619, 0
  %v661 = vsel %vm398, %v620, 0
  %663 = vmatpush.bf16.msra.mxu0 0
  %664 = vmatpush.bf16.msra.mxu0 0
  %665 = vmatpush.bf16.msra.mxu0 %v650
  %666 = vmatpush.bf16.msra.mxu0 %v649
  %667 = vmatpush.bf16.msra.mxu0 %v648
  %668 = vmatpush.bf16.msra.mxu0 %v647
  %669 = vmatpush.bf16.msra.mxu0 %v646
  %670 = vmatpush.bf16.msra.mxu0 %v645
  %671 = vmatmul.bf16.gmra.mxu0 %v658
  %v672 = vpop.f32.mrf.mxu0
  %v673 = vadd.f32 0.0, %v672
  %v674 = vpop.f32.mrf.mxu0
  %v675 = vadd.f32 0.0, %v674
  %676 = vmatmul.bf16.gmra.mxu0 %v661
  %v677 = vpop.f32.mrf.mxu0
  %v678 = vadd.f32 0.0, %v677
  %v679 = vpop.f32.mrf.mxu0
  %v680 = vadd.f32 0.0, %v679
  %681 = vdwg.mxu0
  %v682 = vadd.f32 %v486, %v673
  %v683 = vadd.f32 %v488, %v675
  %v684 = vadd.f32 %v491, %v678
  %v685 = vadd.f32 %v493, %v680
  %v686 = vld [vmem:[%s4] sm:$0xff]
  %v687 = vld [vmem:[%s4 + $0x8] sm:$0xff]
  %v688 = vld [vmem:[%s4 + $0x10] sm:$0xff]
  %v689 = vld [vmem:[%s4 + $0x18] sm:$0xff]
  %691 = vset.pattern.permute.xlu0 0
  %692 = vperm.xlu0 %691, %v686
  %v693 = vpop.permute.xlu0 %692
  %696 = vset.pattern.permute.xlu0 0
  %697 = vperm.xlu0 %696, %v687
  %v698 = vpop.permute.xlu0 %697
  %701 = vset.pattern.permute.xlu0 0
  %702 = vperm.xlu0 %701, %v688
  %v703 = vpop.permute.xlu0 %702
  %706 = vset.pattern.permute.xlu0 0
  %707 = vperm.xlu0 %706, %v689
  %v708 = vpop.permute.xlu0 %707
  %v710 = vadd.f32 %v682, %v693
  %v711 = vadd.f32 %v683, %v698
  %v712 = vadd.f32 %v684, %v703
  %v713 = vadd.f32 %v685, %v708
  %vm714 = vcmp.gt.f32.partialorder %v710, 0.0
  %vm715 = vcmp.gt.f32.partialorder %v711, 0.0
  %vm716 = vcmp.gt.f32.partialorder %v712, 0.0
  %vm717 = vcmp.gt.f32.partialorder %v713, 0.0
  %v718 = vmin.f32 %v710, 0.0
  %v719 = vmin.f32 %v711, 0.0
  %v720 = vmin.f32 %v712, 0.0
  %v721 = vmin.f32 %v713, 0.0
  %v722 = vmul.f32 %v718, 1.442695
  %v723 = vpow.pop %v722
  %v724 = vmul.f32 %v719, 1.442695
  %v725 = vpow.pop %v724
  %v726 = vmul.f32 %v720, 1.442695
  %v727 = vpow.pop %v726
  %v728 = vmul.f32 %v721, 1.442695
  %v729 = vpow.pop %v728
  %v730 = vsub.f32 %v723, 1.0
  %v731 = vsub.f32 %v725, 1.0
  %v732 = vsub.f32 %v727, 1.0
  %v733 = vsub.f32 %v729, 1.0
  %v734 = vsel %vm714, %v710, %v730
  %v735 = vsel %vm715, %v711, %v731
  %v736 = vsel %vm716, %v712, %v732
  %v737 = vsel %vm717, %v713, %v733
  %v738 = vpack.c.bf16 %v734, %v734
  %v739 = vpack.c.bf16 %v735, %v735
  %v740 = vpack.c.bf16 %v736, %v736
  %v741 = vpack.c.bf16 %v737, %v737
  %742 = vst [vmem:[%s5] sm:$0xf] %v738
  %743 = vst [vmem:[%s5 + $0x4] sm:$0xf] %v739
  %744 = vst [vmem:[%s5 + $0x8] sm:$0xf] %v740
  %745 = vst [vmem:[%s5 + $0xc] sm:$0xf] %v741
  // Predicated region
  $region22: #{ddpg_conv_body_forward.1} parent=0 // pred_check
    _
  $region23: #{ddpg_conv_body_forward.1} parent=0 // pred_check_branch
    %747 = sbr.rel (0) target = $region25
  $region24: #{ddpg_conv_body_forward.1} parent=0 // pred_region
    _
  $region25: #{ddpg_conv_body_forward.1} parent=0 // pred_fallthru
    _
  // Predicated region
  $region26: #{ddpg_conv_body_forward.1} parent=0 // pred_check
    _
  $region27: #{ddpg_conv_body_forward.1} parent=0 // pred_check_branch
    %749 = sbr.rel (0) target = $region29
  $region28: #{ddpg_conv_body_forward.1} parent=0 // pred_region
    _
  $region29: #{ddpg_conv_body_forward.1} parent=0 // pred_fallthru
    _

</llo_original>
